<compile_context>
chip_gen: v7x
topology: tpu7x:2x2x1
jax: 0.10.0
libtpu: 0.0.40
codegen_flags: <defaults>
</compile_context>

<pallas_src>
import functools

import jax
import jax.numpy as jnp
from jax.experimental import pallas as pl
from jax.experimental.pallas import tpu as pltpu


def _tod_kernel(indices_ref, proj_ref, x_ref, o_ref, *, p, flip):
    """hash = (idx+199) * proj ; keep = (hash % 10 <= 10p) (inverted if flip);
    out = x * (inv_scale if keep else 0)."""
    idx = indices_ref[...].astype(jnp.float32) + 199.0     # (TB, 1)
    proj = proj_ref[...].astype(jnp.float32)                # (1, D)
    hash_ = idx * proj                                      # (TB, D) outer product (VPU)
    thresh = jnp.float32(p * 10.0)
    m = jnp.mod(hash_, jnp.float32(10.0))
    if flip:
        keep = m > thresh                                   # invert comparison, no 1-mask
        inv_scale = 1.0 / (1.0 - p)
    else:
        keep = m <= thresh
        inv_scale = 1.0 / p
    # Fold the scale into the mask: single where-select + one multiply.
    scale = jnp.where(keep, jnp.float32(inv_scale), jnp.float32(0.0))
    o_ref[...] = (x_ref[...].astype(jnp.float32) * scale).astype(o_ref.dtype)


def make_tod_proj(size, seed=0):
    """Deterministic synthetic init mirroring: (rand(size) + 0.1) * 1000.0"""
    key = jax.random.PRNGKey(seed)
    return (jax.random.uniform(key, (size,), dtype=jnp.float32) + 0.1) * 1000.0


def _choose_block_rows(B, D, itemsize, target_bytes=4 << 20):
    """Pick a batch tile: ~target_bytes per x block, multiple of 8, or full B."""
    if B * D * itemsize <= target_bytes:
        return B                      # single block == full dim, no (8,·) constraint
    tb = (target_bytes // (D * itemsize)) // 8 * 8
    tb = max(8, int(tb))              # D enormous -> minimum legal 8-row tile
    return int(min(tb, (B // 8) * 8)) if B >= 8 else B


def turn_over_dropout(x, proj, indices=None, flips=None, p=0.5, block_rows=None):
    """Forward of TurnOverDropout.

    x:       (B, D) float32/bfloat16
    proj:    (D,)   float32 fixed non-trainable parameter
    indices: (B, 1) or (B,) integer/float, or None (-> identity)
    flips:   None or Python bool (True -> flip mask, scale by 1/(1-p))
    """
    if indices is None:
        assert flips is None
        return x
    # TODO(synk): per-element tensor `flips` (flips.shape == indices.shape) has
    # ambiguous broadcast semantics in the reference; only bool flips supported.
    flip = bool(flips) if flips is not None else False
    if flip:
        assert p < 1.0, "flip path divides by (1 - p)"
    else:
        assert p > 0.0, "no-flip path divides by p"

    B, D = x.shape
    itemsize = jnp.dtype(x.dtype).itemsize
    # Hash math is done in f32 inside the kernel -> feed f32 indices/proj.
    indices_f = jnp.asarray(indices, dtype=jnp.float32).reshape(B, 1)
    proj2d = jnp.asarray(proj, dtype=jnp.float32).reshape(1, D)

    TB = block_rows if block_rows is not None else _choose_block_rows(B, D, itemsize)
    grid = (pl.cdiv(B, TB),)

    # VMEM: 2 buffers each for x and out blocks + tiny indices/proj blocks.
    vmem_need = 2 * TB * D * itemsize * 2 + 2 * TB * 4 + 2 * D * 4
    vmem_limit = int(min(100 << 20, max(vmem_need + (4 << 20), 16 << 20)))

    kernel = functools.partial(_tod_kernel, p=float(p), flip=flip)
    return pl.pallas_call(
        kernel,
        out_shape=jax.ShapeDtypeStruct((B, D), x.dtype),
        grid=grid,
        in_specs=[
            pl.BlockSpec((TB, 1), lambda i: (i, 0)),   # indices: per-tile rows
            pl.BlockSpec((1, D), lambda i: (0, 0)),    # proj: resident (constant block)
            pl.BlockSpec((TB, D), lambda i: (i, 0)),   # x: tiled over batch
        ],
        out_specs=pl.BlockSpec((TB, D), lambda i: (i, 0)),
        compiler_params=pltpu.CompilerParams(
            dimension_semantics=("parallel",),         # v7x: shard tiles across 2 TCs
            vmem_limit_bytes=vmem_limit,
        ),
    )(indices_f, proj2d, x)


def _reference(x, proj, indices, flips, p):
    """Pure-JAX reference mirroring the torch forward (bool flips only), f32 hash."""
    idx = jnp.asarray(indices, dtype=jnp.float32).reshape(-1, 1) + 199.0
    hash_ = idx @ jnp.asarray(proj, dtype=jnp.float32).reshape(1, -1)
    masks = (jnp.mod(hash_, 10.0) <= p * 10.0).astype(jnp.float32)
    xf = x.astype(jnp.float32)
    if flips is not None and bool(flips):
        out = xf * (1.0 - masks) / (1.0 - p)
    else:
        out = xf * masks / p
    return out.astype(x.dtype)


if __name__ == "__main__":
    P = 0.5
    key = jax.random.PRNGKey(0)
    kx, ki, kx2, ki2 = jax.random.split(key, 4)

    # --- small case (single block) ---
    B, SIZE = 8, 128
    x = jax.random.normal(kx, (B, SIZE), dtype=jnp.float32)
    indices = jax.random.randint(ki, (B, 1), 0, 1000, dtype=jnp.int32)
    proj = make_tod_proj(SIZE, seed=0)

    out = jax.block_until_ready(turn_over_dropout(x, proj, indices=indices, flips=None, p=P))
    ref = _reference(x, proj, indices, None, P)
    assert jnp.allclose(out, ref, atol=1e-5, rtol=1e-5), "no-flip mismatch"

    out_f = jax.block_until_ready(turn_over_dropout(x, proj, indices=indices, flips=True, p=P))
    ref_f = _reference(x, proj, indices, True, P)
    assert jnp.allclose(out_f, ref_f, atol=1e-5, rtol=1e-5), "flip mismatch"

    out_id = jax.block_until_ready(turn_over_dropout(x, proj, indices=None))
    assert jnp.array_equal(out_id, x)

    # --- multi-tile case: exercises the batch grid (grid=(2,)) ---
    B2, SIZE2 = 16, 256
    x2 = jax.random.normal(kx2, (B2, SIZE2), dtype=jnp.float32)
    indices2 = jax.random.randint(ki2, (B2, 1), 0, 1000, dtype=jnp.int32)
    proj2 = make_tod_proj(SIZE2, seed=1)
    out2 = jax.block_until_ready(
        turn_over_dropout(x2, proj2, indices=indices2, flips=None, p=P, block_rows=8))
    ref2 = _reference(x2, proj2, indices2, None, P)
    assert jnp.allclose(out2, ref2, atol=1e-5, rtol=1e-5), "tiled no-flip mismatch"

    print("KERNEL_OK")
</pallas_src>

<mosaic_0001>
module attributes {stable_mosaic.version = 11 : i64} {
  func.func @_tod_kernel(%arg0: i32, %arg1: memref<8x1xf32, #tpu.memory_space<vmem>>, %arg2: memref<1x128xf32, #tpu.memory_space<vmem>>, %arg3: memref<8x128xf32, #tpu.memory_space<vmem>>, %arg4: memref<8x128xf32, #tpu.memory_space<vmem>>) attributes {dimension_semantics = [#tpu.dimension_semantics<parallel>], iteration_bounds = array<i64: 1>, scalar_prefetch = 0 : i64, scratch_operands = 0 : i64, tpu.core_type = #tpu.core_type<tc>, window_params = [{transform_indices = @transform_0, window_bounds = array<i64: 8, 1>}, {pipeline_mode = #tpu.pipeline_mode<synchronous>, transform_indices = @transform_1, window_bounds = array<i64: 1, 128>}, {transform_indices = @transform_2, window_bounds = array<i64: 8, 128>}, {transform_indices = @transform_3, window_bounds = array<i64: 8, 128>}]} {
    %c0 = arith.constant 0 : index
    %c0_0 = arith.constant 0 : index
    %0 = vector.load %arg1[%c0, %c0_0] : memref<8x1xf32, #tpu.memory_space<vmem>>, vector<8x1xf32>
    %cst = arith.constant 1.990000e+02 : f32
    %1 = vector.broadcast %cst : f32 to vector<8x1xf32>
    %2 = arith.addf %0, %1 : vector<8x1xf32>
    %c0_1 = arith.constant 0 : index
    %c0_2 = arith.constant 0 : index
    %3 = vector.load %arg2[%c0_1, %c0_2] : memref<1x128xf32, #tpu.memory_space<vmem>>, vector<1x128xf32>
    %4 = vector.broadcast %2 : vector<8x1xf32> to vector<8x128xf32>
    %5 = vector.broadcast %3 : vector<1x128xf32> to vector<8x128xf32>
    %6 = arith.mulf %4, %5 : vector<8x128xf32>
    %cst_3 = arith.constant 1.000000e+01 : f32
    %7 = vector.broadcast %cst_3 : f32 to vector<8x128xf32>
    %8 = arith.remf %6, %7 : vector<8x128xf32>
    %cst_4 = arith.constant 0.000000e+00 : f32
    %9 = vector.broadcast %cst_4 : f32 to vector<8x128xf32>
    %10 = arith.cmpf one, %8, %9 : vector<8x128xf32>
    %cst_5 = arith.constant 0.000000e+00 : f32
    %11 = vector.broadcast %cst_5 : f32 to vector<8x128xf32>
    %12 = arith.cmpf olt, %8, %11 : vector<8x128xf32>
    %cst_6 = arith.constant 0.000000e+00 : f32
    %13 = arith.cmpf olt, %cst_3, %cst_6 : f32
    %14 = vector.broadcast %13 : i1 to vector<8x128xi1>
    %15 = vector.broadcast %14 : vector<8x128xi1> to vector<8x128xi1>
    %16 = arith.xori %12, %15 : vector<8x128xi1>
    %17 = arith.andi %16, %10 : vector<8x128xi1>
    %18 = vector.broadcast %cst_3 : f32 to vector<8x128xf32>
    %19 = arith.addf %8, %18 : vector<8x128xf32>
    %20 = arith.select %17, %19, %8 : vector<8x128xi1>, vector<8x128xf32>
    %cst_7 = arith.constant 5.000000e+00 : f32
    %21 = vector.broadcast %cst_7 : f32 to vector<8x128xf32>
    %22 = arith.cmpf ole, %20, %21 : vector<8x128xf32>
    %cst_8 = arith.constant 2.000000e+00 : f32
    %cst_9 = arith.constant 0.000000e+00 : f32
    %23 = vector.broadcast %cst_8 : f32 to vector<8x128xf32>
    %24 = vector.broadcast %cst_9 : f32 to vector<8x128xf32>
    %25 = arith.select %22, %23, %24 : vector<8x128xi1>, vector<8x128xf32>
    %c0_10 = arith.constant 0 : index
    %c0_11 = arith.constant 0 : index
    %26 = vector.load %arg3[%c0_10, %c0_11] : memref<8x128xf32, #tpu.memory_space<vmem>>, vector<8x128xf32>
    %27 = arith.mulf %26, %25 : vector<8x128xf32>
    %c0_12 = arith.constant 0 : index
    %c0_13 = arith.constant 0 : index
    %28 = vector.load %arg4[%c0_12, %c0_13] : memref<8x128xf32, #tpu.memory_space<vmem>>, vector<8x128xf32>
    tpu.vector_store %arg4[%c0_12, %c0_13], %27 {strides = array<i32>} : memref<8x128xf32, #tpu.memory_space<vmem>>, vector<8x128xf32>,
    return
  }
  func.func @transform_0(%arg0: i32) -> (i32, i32) {
    %c0_i32 = arith.constant 0 : i32
    %c0_i32_0 = arith.constant 0 : i32
    return %arg0, %c0_i32 : i32, i32
  }
  func.func @transform_1(%arg0: i32) -> (i32, i32) {
    %c0_i32 = arith.constant 0 : i32
    %c0_i32_0 = arith.constant 0 : i32
    %c0_i32_1 = arith.constant 0 : i32
    return %c0_i32, %c0_i32_0 : i32, i32
  }
  func.func @transform_2(%arg0: i32) -> (i32, i32) {
    %c0_i32 = arith.constant 0 : i32
    %c0_i32_0 = arith.constant 0 : i32
    return %arg0, %c0_i32 : i32, i32
  }
  func.func @transform_3(%arg0: i32) -> (i32, i32) {
    %c0_i32 = arith.constant 0 : i32
    %c0_i32_0 = arith.constant 0 : i32
    return %arg0, %c0_i32 : i32, i32
  }
}

</mosaic_0001>

<llo_original>
// kernel: tpu_custom_call.1
$region0: #{tpu_custom_call.1}
  #allocation0 [shape = 'u32[]', space=smem, size = 0x4, offset = 0x4, fixed_abs, tag = 'smem constant byte address 0x4 - core index']
  #allocation1 [shape = 'u32[144,128]{1,0:T(1,128)}', space=vmem, size = 0x12000, scoped, tag = 'internal scratch']
  %s0 = inlined_call_operand.vmem [shape: f32[8,1], index: 0, kind: input, shape index: {}]
  %s1 = inlined_call_operand.vmem [shape: f32[1,128], index: 1, kind: input, shape index: {}]
  %s2 = inlined_call_operand.vmem [shape: f32[8,128], index: 2, kind: input, shape index: {}]
  %s3 = inlined_call_operand.hbm [shape: f32[8,128], index: 3, kind: output, shape index: {}]
  %s4 = sld [smem:[#allocation0]]
  $region22: #{tpu_custom_call.1} parent=0
    _
  %s6 = ssub.s32 1, %s4
  %s7 = scalar_select 0, %s6, %s4
  $region1: #{tpu_custom_call.1} parent=0
    #allocation2 [shape = 'u8[4096]{0}', space=vmem, size = 0x1000, scoped, tag = 'output window, operand 0, single buffered']
    #allocation3 [shape = 's32[1]{0}', space=sflag, size = 0x4, scoped, tag = 'scoped memory for tpu_custom_call.1']
    %8 = vsyncpa [#allocation3], 0
    // Predicated region
    $region2: #{tpu_custom_call.1} parent=1 // pred_check
      _
    $region3: #{tpu_custom_call.1} parent=1 // pred_check_branch
      %10 = sbr.rel (0) target = $region5
    $region4: #{tpu_custom_call.1} parent=1 // pred_region
      _
    $region5: #{tpu_custom_call.1} parent=1 // pred_fallthru
      _
    // Predicated region
    $region6: #{tpu_custom_call.1} parent=1 // pred_check
      _
    $region7: #{tpu_custom_call.1} parent=1 // pred_check_branch
      %12 = sbr.rel (0) target = $region9
    $region8: #{tpu_custom_call.1} parent=1 // pred_region
      _
    $region9: #{tpu_custom_call.1} parent=1 // pred_fallthru
      _
    // Predicated region
    $region10: #{tpu_custom_call.1} parent=1 // pred_check
      _
    $region11: #{tpu_custom_call.1} parent=1 // pred_check_branch
      %14 = sbr.rel (0) target = $region13
    $region12: #{tpu_custom_call.1} parent=1 // pred_region
      _
    $region13: #{tpu_custom_call.1} parent=1 // pred_fallthru
      _
    %v15 = vld [vmem:[%s0] sm:$0xff]
    %v16 = vadd.f32 %v15, 199.0
    %v17 = vld [vmem:[%s1] sm:$0x1]
    %19 = vset.pattern.permute.xlu0 0
    %20 = vperm.xlu0 %19, %v16
    %v21 = vpop.permute.xlu0 %20
    %v24 = vlaneseq
    %v25 = vshrl.u32 %v24, 7
    %v26 = vsub.s32 0, %v25
    %v27 = vrot.slane %v17, %v26
    %v29 = vmul.f32 %v21, %v27
    %v30 = vand.u32 2147483647, %v29
    %v31 = vrcp.pop 10.0
    %v32 = vmul.f32 %v30, %v31
    %v33 = vfloor.f32 %v32
    %v34 = vmul.f32 %v33, 10.0
    %v35 = vsub.f32 %v30, %v34
    %vm36 = vcmp.eq.f32.partialorder %v35, 10.0
    %v37 = vsel %vm36, 0.0, %v35
    %v38 = vand.u32 2147483647, %v37
    %v39 = vand.u32 %v29, 2147483648
    %v40 = vor.u32 %v38, %v39
    %vm41 = vcmp.ne.f32.partialorder %v40, 0.0
    %vm42 = vcmp.lt.f32.partialorder %v40, 0.0
    %vm43 = vmand %vm42, %vm41
    %v44 = vadd.f32 %v40, 10.0
    %v45 = vsel %vm43, %v44, %v40
    %vm46 = vcmp.le.f32.partialorder %v45, 5.0
    %v47 = vsel %vm46, 2.0, 0.0
    %v48 = vld [vmem:[%s2] sm:$0xff]
    %v49 = vmul.f32 %v48, %v47
    %50 = vst [vmem:[#allocation2] sm:$0xff] %v49
    // Predicated region
    $region14: #{tpu_custom_call.1} parent=1 // pred_check
      _
    $region15: #{tpu_custom_call.1} parent=1 // pred_check_branch
      %52 = sbr.rel (0) target = $region17
    $region16: #{tpu_custom_call.1} parent=1 // pred_region
      %s54 = ssub.s32 128, 128
      %55 = vsyncadd [#allocation3], %s54
      %s57 = sshll.u32 [#allocation2], 4
      %s58 = int_to_ptr.vmem [resolvable:$true] %s57
      %60 = dma.vmem_to_hbm [thread:$0]  %s58, 128, %s3, [#allocation3]
    $region17: #{tpu_custom_call.1} parent=1 // pred_fallthru
      _
    // Predicated region
    $region18: #{tpu_custom_call.1} parent=1 // pred_check
      _
    $region19: #{tpu_custom_call.1} parent=1 // pred_check_branch
      %62 = sbr.rel (0) target = $region21
    $region20: #{tpu_custom_call.1} parent=1 // pred_region
      %63 = dma.done [#allocation3], 128
    $region21: #{tpu_custom_call.1} parent=1 // pred_fallthru
      _
    %64 = vsyncpa [#allocation3], 1

</llo_original>
